<compile_context>
chip_gen: v5e
topology: v5e:2x2
jax: 0.10.0
libtpu: 0.0.40
codegen_flags: <defaults>
</compile_context>

<pallas_src>
import functools

import jax
import jax.numpy as jnp
from jax.experimental import pallas as pl
from jax.experimental.pallas import tpu as pltpu


# TODO(synk): ConvMixerLayer (AttnLayer.unit) was not provided in the spec;
# only the Attn forward is implemented here.


def _fma_kernel(coeff_ref, *refs, n_inputs):
    """refs = (x_0, ..., x_{D-1}, out); coeff_ref is (B, D) in SMEM."""
    x_refs = refs[:n_inputs]
    o_ref = refs[n_inputs]
    b = pl.program_id(0)

    # Per-vreg f32 accumulation; tiles stay in native dtype in VMEM.
    acc = x_refs[0][...].astype(jnp.float32) * coeff_ref[b, 0]
    for d in range(1, n_inputs):
        acc = acc + x_refs[d][...].astype(jnp.float32) * coeff_ref[b, d]
    o_ref[...] = acc.astype(o_ref.dtype)


def _compute_coeffs(xs, gammas, temperature):
    """Tiny prologue in plain JAX: pooled -> attention -> final_attn -> coeffs.

    Returns (B, D) f32 coefficients with the reference's indexing:
      coeff[:, 0] = final_attn[:, 0]          (used by xs[0])
      coeff[:, d] = final_attn[:, d - 1]      (used by xs[d], d >= 1)
    """
    attn_depth = gammas.shape[0]
    assert attn_depth >= 1, "attn_depth must be >= 1 (matches PyTorch assert)"
    D = len(xs)

    # AdaptiveAvgPool2d((1,1)) + Flatten  ->  mean over spatial dims.
    pooled = jnp.stack(
        [jnp.mean(x.astype(jnp.float32), axis=(2, 3)) for x in xs], axis=1
    )                                                             # (B, D, C)

    inv_t = jnp.float32(1.0 / temperature)
    final_attn = None
    for i in range(attn_depth):
        s = pooled * gammas[i].astype(jnp.float32)[None, None, :]  # LayerScaler
        attn = jnp.einsum("bdc,bec->bde", s, s,
                          preferred_element_type=jnp.float32) * inv_t
        attn = jax.nn.softmax(attn, axis=-1)
        if i == 0:
            final_attn = jnp.mean(attn, axis=-2)                   # (B, D)
        else:
            # einsum('bde,bd->bd', attn, final_attn) == rowsum(attn) * final_attn
            final_attn = jnp.sum(attn, axis=-1) * final_attn       # (B, D)

    coeffs = jnp.concatenate([final_attn[:, :1], final_attn[:, : D - 1]], axis=1)
    return coeffs                                                  # (B, D) f32


def attn_forward(xs, gammas, temperature):
    """xs: list of D arrays (B, C, H, W); gammas: (attn_depth, C)."""
    B, C, H, W = xs[0].shape
    D = len(xs)
    N = C * H * W

    coeffs = _compute_coeffs(xs, gammas, temperature)              # (B, D) f32

    # Lane-dense layout: (B, S, LANE) with LANE = 128 when possible.
    if N % 128 == 0:
        LANE = 128
    else:
        LANE = N            # fallback: full extent on the lane axis
    S = N // LANE
    # Tile the sublane axis: full extent if small, else 512 rows (mult. of 8).
    TILE_S = S if S <= 512 else 512

    # Row-major reshapes are free (no HBM copy, unlike jnp.stack).
    xs_flat = [x.reshape(B, S, LANE) for x in xs]

    grid = (B, pl.cdiv(S, TILE_S))
    x_spec = pl.BlockSpec((1, TILE_S, LANE), lambda b, s: (b, s, 0))

    kernel = functools.partial(_fma_kernel, n_inputs=D)
    out = pl.pallas_call(
        kernel,
        out_shape=jax.ShapeDtypeStruct((B, S, LANE), xs[0].dtype),
        grid=grid,
        in_specs=[pl.BlockSpec(memory_space=pltpu.MemorySpace.SMEM)]  # coeffs
                 + [x_spec] * D,
        out_specs=pl.BlockSpec((1, TILE_S, LANE), lambda b, s: (b, s, 0)),
        compiler_params=pltpu.CompilerParams(
            dimension_semantics=("parallel", "parallel")),
    )(coeffs, *xs_flat)

    return out.reshape(B, C, H, W)


def attn_reference(xs, gammas, temperature):
    """Pure-JAX transcription of the PyTorch forward (for verification)."""
    attn_depth = gammas.shape[0]
    final_attn = None
    for i in range(attn_depth):
        squeezed = jnp.stack(
            [jnp.mean(x, axis=(2, 3)) * gammas[i] for x in xs])   # (D, B, C)
        attn = jnp.einsum("dbh,ebh->bde", squeezed, squeezed) / temperature
        attn = jax.nn.softmax(attn, axis=-1)
        if i == 0:
            final_attn = attn.mean(axis=-2)
        else:
            final_attn = jnp.einsum("bde,bd->bd", attn, final_attn)
    next_x = xs[0] * final_attn[:, 0, None, None, None]
    for i, x in enumerate(xs[1:]):
        next_x = next_x + x * final_attn[:, i, None, None, None]
    return next_x


if __name__ == "__main__":
    B, hidden_dim, H, W = 2, 32, 8, 8
    num_inputs = 3          # len(xs)
    attn_depth = 2
    temperature = 0.5
    init_scale = 1.0

    key = jax.random.PRNGKey(0)
    kx, kg = jax.random.split(key)
    xkeys = jax.random.split(kx, num_inputs)
    xs = [jax.random.normal(k, (B, hidden_dim, H, W), dtype=jnp.float32)
          for k in xkeys]
    # LayerScaler params (one per attn depth): init_scale * ones plus a small
    # deterministic perturbation so the compute is non-degenerate.
    gammas = (init_scale * jnp.ones((attn_depth, hidden_dim), jnp.float32)
              + 0.05 * jax.random.normal(kg, (attn_depth, hidden_dim), jnp.float32))

    out = attn_forward(xs, gammas, temperature)
    out = jax.block_until_ready(out)

    ref = attn_reference(xs, gammas, temperature)
    assert out.shape == (B, hidden_dim, H, W)
    assert jnp.allclose(out, ref, rtol=1e-5, atol=1e-5), "mismatch vs JAX reference"
    # Explicit check of the reference's reuse of final_attn[:, 0] for xs[0] and xs[1]:
    coeffs = _compute_coeffs(xs, gammas, temperature)
    assert jnp.allclose(coeffs[:, 0], coeffs[:, 1]), "coeff[:,0] must equal coeff[:,1]"
    print("KERNEL_OK")
</pallas_src>

<mosaic_0001>
module attributes {stable_mosaic.version = 11 : i64} {
  func.func @_fma_kernel(%arg0: i32, %arg1: i32, %arg2: memref<2x3xf32, #tpu.memory_space<smem>>, %arg3: memref<1x16x128xf32, #tpu.memory_space<vmem>>, %arg4: memref<1x16x128xf32, #tpu.memory_space<vmem>>, %arg5: memref<1x16x128xf32, #tpu.memory_space<vmem>>, %arg6: memref<1x16x128xf32, #tpu.memory_space<vmem>>) attributes {dimension_semantics = [#tpu.dimension_semantics<parallel>, #tpu.dimension_semantics<parallel>], iteration_bounds = array<i64: 2, 1>, scalar_prefetch = 0 : i64, scratch_operands = 0 : i64, tpu.core_type = #tpu.core_type<tc>, window_params = [{transform_indices = @transform_0, window_bounds = array<i64: 2, 3>}, {transform_indices = @transform_1, window_bounds = array<i64: 1, 16, 128>}, {transform_indices = @transform_2, window_bounds = array<i64: 1, 16, 128>}, {transform_indices = @transform_3, window_bounds = array<i64: 1, 16, 128>}, {transform_indices = @transform_4, window_bounds = array<i64: 1, 16, 128>}]} {
    %c0 = arith.constant 0 : index
    %c0_0 = arith.constant 0 : index
    %c0_1 = arith.constant 0 : index
    %0 = vector.load %arg3[%c0, %c0_0, %c0_1] : memref<1x16x128xf32, #tpu.memory_space<vmem>>, vector<1x16x128xf32>
    %1 = arith.index_cast %arg0 : i32 to index
    %c0_2 = arith.constant 0 : index
    %2 = memref.load %arg2[%1, %c0_2] : memref<2x3xf32, #tpu.memory_space<smem>>
    %3 = vector.broadcast %2 : f32 to vector<1x16x128xf32>
    %4 = arith.mulf %0, %3 : vector<1x16x128xf32>
    %c0_3 = arith.constant 0 : index
    %c0_4 = arith.constant 0 : index
    %c0_5 = arith.constant 0 : index
    %5 = vector.load %arg4[%c0_3, %c0_4, %c0_5] : memref<1x16x128xf32, #tpu.memory_space<vmem>>, vector<1x16x128xf32>
    %6 = arith.index_cast %arg0 : i32 to index
    %c1 = arith.constant 1 : index
    %7 = memref.load %arg2[%6, %c1] : memref<2x3xf32, #tpu.memory_space<smem>>
    %8 = vector.broadcast %7 : f32 to vector<1x16x128xf32>
    %9 = arith.mulf %5, %8 : vector<1x16x128xf32>
    %10 = arith.addf %4, %9 : vector<1x16x128xf32>
    %c0_6 = arith.constant 0 : index
    %c0_7 = arith.constant 0 : index
    %c0_8 = arith.constant 0 : index
    %11 = vector.load %arg5[%c0_6, %c0_7, %c0_8] : memref<1x16x128xf32, #tpu.memory_space<vmem>>, vector<1x16x128xf32>
    %12 = arith.index_cast %arg0 : i32 to index
    %c2 = arith.constant 2 : index
    %13 = memref.load %arg2[%12, %c2] : memref<2x3xf32, #tpu.memory_space<smem>>
    %14 = vector.broadcast %13 : f32 to vector<1x16x128xf32>
    %15 = arith.mulf %11, %14 : vector<1x16x128xf32>
    %16 = arith.addf %10, %15 : vector<1x16x128xf32>
    %c0_9 = arith.constant 0 : index
    %c0_10 = arith.constant 0 : index
    %c0_11 = arith.constant 0 : index
    %17 = vector.load %arg6[%c0_9, %c0_10, %c0_11] : memref<1x16x128xf32, #tpu.memory_space<vmem>>, vector<1x16x128xf32>
    tpu.vector_store %arg6[%c0_9, %c0_10, %c0_11], %16 {strides = array<i32>} : memref<1x16x128xf32, #tpu.memory_space<vmem>>, vector<1x16x128xf32>,
    return
  }
  func.func @transform_0(%arg0: i32, %arg1: i32) -> (i32, i32) {
    %c0_i32 = arith.constant 0 : i32
    %c0_i32_0 = arith.constant 0 : i32
    %c0_i32_1 = arith.constant 0 : i32
    return %c0_i32, %c0_i32_0 : i32, i32
  }
  func.func @transform_1(%arg0: i32, %arg1: i32) -> (i32, i32, i32) {
    %c0_i32 = arith.constant 0 : i32
    %c0_i32_0 = arith.constant 0 : i32
    return %arg0, %arg1, %c0_i32 : i32, i32, i32
  }
  func.func @transform_2(%arg0: i32, %arg1: i32) -> (i32, i32, i32) {
    %c0_i32 = arith.constant 0 : i32
    %c0_i32_0 = arith.constant 0 : i32
    return %arg0, %arg1, %c0_i32 : i32, i32, i32
  }
  func.func @transform_3(%arg0: i32, %arg1: i32) -> (i32, i32, i32) {
    %c0_i32 = arith.constant 0 : i32
    %c0_i32_0 = arith.constant 0 : i32
    return %arg0, %arg1, %c0_i32 : i32, i32, i32
  }
  func.func @transform_4(%arg0: i32, %arg1: i32) -> (i32, i32, i32) {
    %c0_i32 = arith.constant 0 : i32
    %c0_i32_0 = arith.constant 0 : i32
    return %arg0, %arg1, %c0_i32 : i32, i32, i32
  }
}

</mosaic_0001>

<llo_original>
// kernel: tpu_custom_call.1
$region0: #{tpu_custom_call.1}
  #allocation0 [shape = 'u32[]', space=smem, size = 0x4, offset = 0x4, fixed_abs, tag = 'smem constant byte address 0x4 - core index']
  #allocation1 [shape = 'u32[72,128]{1,0:T(1,128)}', space=vmem, size = 0x9000, scoped, tag = 'internal scratch']
  %s0 = inlined_call_operand.hbm [shape: f32[2,3], index: 0, kind: input, shape index: {}]
  %s1 = inlined_call_operand.hbm [shape: f32[2,16,128], index: 1, kind: input, shape index: {}]
  %s2 = inlined_call_operand.hbm [shape: f32[2,16,128], index: 2, kind: input, shape index: {}]
  %s3 = inlined_call_operand.hbm [shape: f32[2,16,128], index: 3, kind: input, shape index: {}]
  %s4 = inlined_call_operand.hbm [shape: f32[2,16,128], index: 4, kind: output, shape index: {}]
  %s5 = sld [smem:[#allocation0]]
  $region65: #{tpu_custom_call.1} parent=0
    _
  %s7 = ssub.s32 1, %s5
  %s8 = scalar_select 0, %s7, %s5
  $region1: #{tpu_custom_call.1} parent=0
    #allocation2 [shape = 'u8[1024]{0}', space=smem, size = 0x400, scoped, tag = 'input window, operand 0, single buffered']
    #allocation3 [shape = 's32[2]{0}', space=sflag, size = 0x8, scoped, tag = 'scoped memory for tpu_custom_call.1']
    #allocation4 [shape = 's32[2]{0}', space=sflag, size = 0x8, scoped, tag = 'scoped memory for tpu_custom_call.1']
    #allocation5 [shape = 's32[2]{0}', space=sflag, size = 0x8, scoped, tag = 'scoped memory for tpu_custom_call.1']
    #allocation6 [shape = 'u8[16384]{0}', space=vmem, size = 0x4000, scoped, tag = 'input window, operand 1']
    #allocation7 [shape = 'u8[16384]{0}', space=vmem, size = 0x4000, scoped, tag = 'input window, operand 2']
    #allocation8 [shape = 's32[2]{0}', space=sflag, size = 0x8, scoped, tag = 'scoped memory for tpu_custom_call.1']
    #allocation9 [shape = 'u8[16384]{0}', space=vmem, size = 0x4000, scoped, tag = 'input window, operand 3']
    #allocation10 [shape = 'u8[16384]{0}', space=vmem, size = 0x4000, scoped, tag = 'output window, operand 0']
    %9 = vsyncpa [#allocation5], 0
    %10 = vsyncpa [#allocation3], 0
    %s11 = scalar_lea.sflag [#allocation3], 1
    %12 = vsyncpa %s11, 0
    %13 = vsyncpa [#allocation8], 0
    %s14 = scalar_lea.sflag [#allocation8], 1
    %15 = vsyncpa %s14, 0
    %16 = vsyncpa [#allocation4], 0
    %s17 = scalar_lea.sflag [#allocation4], 1
    %18 = vsyncpa %s17, 0
    loop: start=0, step=1, limit=4
    $region2: #{tpu_custom_call.1} parent=1 // loop_pre_header
      _
    $region3: #{tpu_custom_call.1} parent=1 // loop_header
      %s20 = sphi 0, %s24
      %p21 = scmp.ge.s32.totalorder %s20, 4
      %s27 = sphi 0, %s39
      %s28 = sphi 0, %s35
      %s29 = sphi 0, %s27
      %s30 = sphi 0, %s28
      %s31 = sphi 0, %s29
      %s32 = sphi 0, %s30
      %s40 = sphi 0, %s40
      %s42 = sphi 0, %s40
      %s43 = sphi 0, %s42
      %s57 = sphi 0, %s43
      %s65 = sphi 0, %s67
      %s68 = sphi 0, %s65
      %s69 = sphi 0, %s68
      %s85 = sphi 0, %s69
      %s93 = sphi 0, %s95
      %s96 = sphi 0, %s93
      %s97 = sphi 0, %s96
      %s113 = sphi 0, %s97
      %s121 = sphi 0, %s123
      %s124 = sphi 0, %s121
      %s125 = sphi 0, %s124
      %s141 = sphi 0, %s125
      %s149 = sphi 0, %s151
      %s152 = sphi 0, %s149
      %s153 = sphi 0, %s152
      %s169 = sphi 0, %s153
    $region4: #{tpu_custom_call.1} parent=1 // loop_header_branch
      %23 = sbr.rel (%p21) target = $region8
    $region5: #{tpu_custom_call.1} parent=1 // loop_body
      %s25 = ssub.s32 %s20, 1
      %s26 = ssub.s32 %s20, 2
      %s33 = sadd.s32 1, %s28
      %p34 = scmp.ge.s32.totalorder %s33, 1
      %s35 = scalar_select %p34, 0, %s33
      %s36 = sadd.s32 1, %s27
      %s37 = scalar_select %p34, %s36, %s27
      %p38 = scmp.ge.s32.totalorder %s37, 2
      %s39 = scalar_select %p38, 0, %s37
      %s41 = sadd.s32 %s40, 1
      %p44 = scmp.eq.s32.totalorder %s20, 1
      %p45 = scmp.ne.s32.totalorder %s40, %s42
      %p46 = scmp.eq.s32.totalorder %s20, 0
      %p47 = por %p45, %p46
      %p48 = scmp.ne.s32.totalorder %s40, %s42
      %p49 = scmp.eq.s32.totalorder %s25, 1
      %p50 = por %p48, %p49
      %p51 = scmp.ne.s32.totalorder %s42, %s43
      %p52 = scmp.eq.s32.totalorder %s25, 0
      %p53 = por %p51, %p52
      %p54 = scmp.ne.s32.totalorder %s42, %s43
      %p55 = scmp.eq.s32.totalorder %s26, 1
      %p56 = por %p54, %p55
      %p58 = scmp.ne.s32.totalorder %s43, %s57
      %p59 = scmp.eq.s32.totalorder %s26, 0
      %p60 = por %p58, %p59
      %s61 = ssub.s32 %s27, %s39
      %s62 = ssub.s32 %s28, %s35
      %s63 = sor.u32 %s61, %s62
      %p64 = scmp.eq.s32.totalorder %s63, 0
      %s66 = sadd.s32 %s65, 1
      %s67 = scalar_select %p64, %s65, %s66
      %p70 = pneg %p64
      %p71 = scmp.eq.s32.totalorder %s20, 1
      %p72 = por %p70, %p71
      %p73 = scmp.ne.s32.totalorder %s65, %s68
      %p74 = scmp.eq.s32.totalorder %s20, 0
      %p75 = por %p73, %p74
      %p76 = scmp.ne.s32.totalorder %s65, %s68
      %p77 = scmp.eq.s32.totalorder %s25, 1
      %p78 = por %p76, %p77
      %p79 = scmp.ne.s32.totalorder %s68, %s69
      %p80 = scmp.eq.s32.totalorder %s25, 0
      %p81 = por %p79, %p80
      %p82 = scmp.ne.s32.totalorder %s68, %s69
      %p83 = scmp.eq.s32.totalorder %s26, 1
      %p84 = por %p82, %p83
      %p86 = scmp.ne.s32.totalorder %s69, %s85
      %p87 = scmp.eq.s32.totalorder %s26, 0
      %p88 = por %p86, %p87
      %s89 = ssub.s32 %s27, %s39
      %s90 = ssub.s32 %s28, %s35
      %s91 = sor.u32 %s89, %s90
      %p92 = scmp.eq.s32.totalorder %s91, 0
      %s94 = sadd.s32 %s93, 1
      %s95 = scalar_select %p92, %s93, %s94
      %p98 = pneg %p92
      %p99 = scmp.eq.s32.totalorder %s20, 1
      %p100 = por %p98, %p99
      %p101 = scmp.ne.s32.totalorder %s93, %s96
      %p102 = scmp.eq.s32.totalorder %s20, 0
      %p103 = por %p101, %p102
      %p104 = scmp.ne.s32.totalorder %s93, %s96
      %p105 = scmp.eq.s32.totalorder %s25, 1
      %p106 = por %p104, %p105
      %p107 = scmp.ne.s32.totalorder %s96, %s97
      %p108 = scmp.eq.s32.totalorder %s25, 0
      %p109 = por %p107, %p108
      %p110 = scmp.ne.s32.totalorder %s96, %s97
      %p111 = scmp.eq.s32.totalorder %s26, 1
      %p112 = por %p110, %p111
      %p114 = scmp.ne.s32.totalorder %s97, %s113
      %p115 = scmp.eq.s32.totalorder %s26, 0
      %p116 = por %p114, %p115
      %s117 = ssub.s32 %s27, %s39
      %s118 = ssub.s32 %s28, %s35
      %s119 = sor.u32 %s117, %s118
      %p120 = scmp.eq.s32.totalorder %s119, 0
      %s122 = sadd.s32 %s121, 1
      %s123 = scalar_select %p120, %s121, %s122
      %p126 = pneg %p120
      %p127 = scmp.eq.s32.totalorder %s20, 1
      %p128 = por %p126, %p127
      %p129 = scmp.ne.s32.totalorder %s121, %s124
      %p130 = scmp.eq.s32.totalorder %s20, 0
      %p131 = por %p129, %p130
      %p132 = scmp.ne.s32.totalorder %s121, %s124
      %p133 = scmp.eq.s32.totalorder %s25, 1
      %p134 = por %p132, %p133
      %p135 = scmp.ne.s32.totalorder %s124, %s125
      %p136 = scmp.eq.s32.totalorder %s25, 0
      %p137 = por %p135, %p136
      %p138 = scmp.ne.s32.totalorder %s124, %s125
      %p139 = scmp.eq.s32.totalorder %s26, 1
      %p140 = por %p138, %p139
      %p142 = scmp.ne.s32.totalorder %s125, %s141
      %p143 = scmp.eq.s32.totalorder %s26, 0
      %p144 = por %p142, %p143
      %s145 = ssub.s32 %s27, %s39
      %s146 = ssub.s32 %s28, %s35
      %s147 = sor.u32 %s145, %s146
      %p148 = scmp.eq.s32.totalorder %s147, 0
      %s150 = sadd.s32 %s149, 1
      %s151 = scalar_select %p148, %s149, %s150
      %p154 = pneg %p148
      %p155 = scmp.eq.s32.totalorder %s20, 1
      %p156 = por %p154, %p155
      %p157 = scmp.ne.s32.totalorder %s149, %s152
      %p158 = scmp.eq.s32.totalorder %s20, 0
      %p159 = por %p157, %p158
      %p160 = scmp.ne.s32.totalorder %s149, %s152
      %p161 = scmp.eq.s32.totalorder %s25, 1
      %p162 = por %p160, %p161
      %p163 = scmp.ne.s32.totalorder %s152, %s153
      %p164 = scmp.eq.s32.totalorder %s25, 0
      %p165 = por %p163, %p164
      %p166 = scmp.ne.s32.totalorder %s152, %s153
      %p167 = scmp.eq.s32.totalorder %s26, 1
      %p168 = por %p166, %p167
      %p170 = scmp.ne.s32.totalorder %s153, %s169
      %p171 = scmp.eq.s32.totalorder %s26, 0
      %p172 = por %p170, %p171
      %p173 = scmp.le.s32.totalorder 1, %s20
      %p174 = scmp.lt.s32.totalorder %s20, 3
      %p175 = pnand %p173, %p174
      %p176 = pneg %p175
      // Predicated region
      $region9: #{tpu_custom_call.1} parent=5 // pred_check
        _
      $region10: #{tpu_custom_call.1} parent=5 // pred_check_branch
        %178 = sbr.rel (%p175) target = $region12
      $region11: #{tpu_custom_call.1} parent=5 // pred_region
        %s179 = ssub.s32 %s20, 1
        // Predicated region
        $region13: #{tpu_custom_call.1} parent=11 // pred_check
          %p180 = pneg %p53
        $region14: #{tpu_custom_call.1} parent=11 // pred_check_branch
          %182 = sbr.rel (%p180) target = $region16
        $region15: #{tpu_custom_call.1} parent=11 // pred_region
          %184 = vsyncadd [#allocation5], 0
          %s186 = sshll.u32 %s0, 4
          %s187 = int_to_ptr.hbm [resolvable:$true] %s186
          %189 = dma.hbm_to_smem %s187, 32, [#allocation2], [#allocation5]
        $region16: #{tpu_custom_call.1} parent=11 // pred_fallthru
          _
      $region12: #{tpu_custom_call.1} parent=5 // pred_fallthru
        _
      %p190 = scmp.lt.s32.totalorder %s20, 2
      // Predicated region
      $region17: #{tpu_custom_call.1} parent=5 // pred_check
        %p191 = pneg %p190
      $region18: #{tpu_custom_call.1} parent=5 // pred_check_branch
        %193 = sbr.rel (%p191) target = $region20
      $region19: #{tpu_custom_call.1} parent=5 // pred_region
        // Predicated region
        $region21: #{tpu_custom_call.1} parent=19 // pred_check
          %p194 = pneg %p75
        $region22: #{tpu_custom_call.1} parent=19 // pred_check_branch
          %196 = sbr.rel (%p194) target = $region24
        $region23: #{tpu_custom_call.1} parent=19 // pred_region
          %s197 = sand.u32 %s65, 1
          %s198 = scalar_lea.sflag [#allocation3], %s197
          %s199 = sand.u32 %s65, 1
          %s200 = smul.addr %s199, 16
          %s201 = scalar_lea.vmem [#allocation6], %s200
          %s202 = smul.u32 2, %s28
          %204 = vsyncadd %s198, 0
          %s205 = smul.addr %s27, 2
          %s206 = sadd.s32 %s202, %s205
          %s207 = smul.addr %s206, 8
          %s208 = scalar_lea.hbm %s1, %s207
          %s209 = sshll.u32 %s208, 4
          %s210 = int_to_ptr.hbm [resolvable:$true] %s209
          %s211 = sshll.u32 %s201, 4
          %s212 = int_to_ptr.vmem [resolvable:$true] %s211
          %217 = dma.hbm_to_vmem [thread:$0]  %s210, 256, %s212, %s198, 128, 128, 8
        $region24: #{tpu_custom_call.1} parent=19 // pred_fallthru
          _
        // Predicated region
        $region25: #{tpu_custom_call.1} parent=19 // pred_check
          %p218 = pneg %p103
        $region26: #{tpu_custom_call.1} parent=19 // pred_check_branch
          %220 = sbr.rel (%p218) target = $region28
        $region27: #{tpu_custom_call.1} parent=19 // pred_region
          %s221 = sand.u32 %s20, 1
          %s222 = scalar_lea.sflag [#allocation8], %s221
          %s223 = sand.u32 %s93, 1
          %s224 = smul.addr %s223, 16
          %s225 = scalar_lea.vmem [#allocation7], %s224
          %s226 = smul.u32 2, %s28
          %228 = vsyncadd %s222, 0
          %s229 = smul.addr %s27, 2
          %s230 = sadd.s32 %s226, %s229
          %s231 = smul.addr %s230, 8
          %s232 = scalar_lea.hbm %s2, %s231
          %s233 = sshll.u32 %s232, 4
          %s234 = int_to_ptr.hbm [resolvable:$true] %s233
          %s235 = sshll.u32 %s225, 4
          %s236 = int_to_ptr.vmem [resolvable:$true] %s235
          %241 = dma.hbm_to_vmem [thread:$0]  %s234, 256, %s236, %s222, 128, 128, 8
        $region28: #{tpu_custom_call.1} parent=19 // pred_fallthru
          _
        // Predicated region
        $region29: #{tpu_custom_call.1} parent=19 // pred_check
          %p242 = pneg %p131
        $region30: #{tpu_custom_call.1} parent=19 // pred_check_branch
          %244 = sbr.rel (%p242) target = $region32
        $region31: #{tpu_custom_call.1} parent=19 // pred_region
          %s245 = sand.u32 %s20, 1
          %s246 = scalar_lea.sflag [#allocation8], %s245
          %s247 = sand.u32 %s121, 1
          %s248 = smul.addr %s247, 16
          %s249 = scalar_lea.vmem [#allocation9], %s248
          %s250 = smul.u32 2, %s28
          %252 = vsyncadd %s246, 0
          %s253 = smul.addr %s27, 2
          %s254 = sadd.s32 %s250, %s253
          %s255 = smul.addr %s254, 8
          %s256 = scalar_lea.hbm %s3, %s255
          %s257 = sshll.u32 %s256, 4
          %s258 = int_to_ptr.hbm [resolvable:$true] %s257
          %s259 = sshll.u32 %s249, 4
          %s260 = int_to_ptr.vmem [resolvable:$true] %s259
          %265 = dma.hbm_to_vmem [thread:$0]  %s258, 256, %s260, %s246, 128, 128, 8
        $region32: #{tpu_custom_call.1} parent=19 // pred_fallthru
          _
      $region20: #{tpu_custom_call.1} parent=5 // pred_fallthru
        _
      %p266 = scmp.le.s32.totalorder 1, %s20
      %p267 = scmp.lt.s32.totalorder %s20, 3
      %p268 = pnand %p266, %p267
      %p269 = pneg %p268
      // Predicated region
      $region33: #{tpu_custom_call.1} parent=5 // pred_check
        _
      $region34: #{tpu_custom_call.1} parent=5 // pred_check_branch
        %271 = sbr.rel (%p268) target = $region36
      $region35: #{tpu_custom_call.1} parent=5 // pred_region
        %s272 = ssub.s32 %s20, 1
        // Predicated region
        $region37: #{tpu_custom_call.1} parent=35 // pred_check
          %p273 = pneg %p53
        $region38: #{tpu_custom_call.1} parent=35 // pred_check_branch
          %275 = sbr.rel (%p273) target = $region40
        $region39: #{tpu_custom_call.1} parent=35 // pred_region
          %277 = dma.done [#allocation5], 32
        $region40: #{tpu_custom_call.1} parent=35 // pred_fallthru
          _
        %s278 = sand.u32 %s68, 1
        %s279 = scalar_lea.sflag [#allocation3], %s278
        %s280 = sand.u32 %s68, 1
        %s281 = smul.addr %s280, 16
        %s282 = scalar_lea.vmem [#allocation6], %s281
        // Predicated region
        $region41: #{tpu_custom_call.1} parent=35 // pred_check
          %p283 = pneg %p81
        $region42: #{tpu_custom_call.1} parent=35 // pred_check_branch
          %285 = sbr.rel (%p283) target = $region44
        $region43: #{tpu_custom_call.1} parent=35 // pred_region
          %287 = dma.done %s279, 256
        $region44: #{tpu_custom_call.1} parent=35 // pred_fallthru
          _
        %s288 = sand.u32 %s25, 1
        %s289 = scalar_lea.sflag [#allocation8], %s288
        %s290 = sand.u32 %s96, 1
        %s291 = smul.addr %s290, 16
        %s292 = scalar_lea.vmem [#allocation7], %s291
        // Predicated region
        $region45: #{tpu_custom_call.1} parent=35 // pred_check
          %p293 = pneg %p109
        $region46: #{tpu_custom_call.1} parent=35 // pred_check_branch
          %295 = sbr.rel (%p293) target = $region48
        $region47: #{tpu_custom_call.1} parent=35 // pred_region
          %297 = dma.done %s289, 256
        $region48: #{tpu_custom_call.1} parent=35 // pred_fallthru
          _
        %s298 = sand.u32 %s25, 1
        %s299 = scalar_lea.sflag [#allocation8], %s298
        %s300 = sand.u32 %s124, 1
        %s301 = smul.addr %s300, 16
        %s302 = scalar_lea.vmem [#allocation9], %s301
        // Predicated region
        $region49: #{tpu_custom_call.1} parent=35 // pred_check
          %p303 = pneg %p137
        $region50: #{tpu_custom_call.1} parent=35 // pred_check_branch
          %305 = sbr.rel (%p303) target = $region52
        $region51: #{tpu_custom_call.1} parent=35 // pred_region
          %307 = dma.done %s299, 256
        $region52: #{tpu_custom_call.1} parent=35 // pred_fallthru
          _
        %308 = sfence
        %p309 = pneg %p53
        %p310 = pneg %p50
        %s311 = sand.u32 %s68, 1
        %s312 = scalar_lea.sflag [#allocation3], %s311
        %s313 = sand.u32 %s68, 1
        %s314 = smul.addr %s313, 16
        %s315 = scalar_lea.vmem [#allocation6], %s314
        %p316 = pneg %p81
        %p317 = pneg %p78
        %s318 = sand.u32 %s25, 1
        %s319 = scalar_lea.sflag [#allocation8], %s318
        %s320 = sand.u32 %s96, 1
        %s321 = smul.addr %s320, 16
        %s322 = scalar_lea.vmem [#allocation7], %s321
        %p323 = pneg %p109
        %p324 = pneg %p106
        %s325 = sand.u32 %s25, 1
        %s326 = scalar_lea.sflag [#allocation8], %s325
        %s327 = sand.u32 %s124, 1
        %s328 = smul.addr %s327, 16
        %s329 = scalar_lea.vmem [#allocation9], %s328
        %p330 = pneg %p137
        %p331 = pneg %p134
        %p332 = pneg %p165
        %p333 = pneg %p162
        %s334 = sand.u32 %s152, 1
        %s335 = scalar_lea.sflag [#allocation4], %s334
        %s336 = sand.u32 %s152, 1
        %s337 = smul.addr %s336, 16
        %s338 = scalar_lea.vmem [#allocation10], %s337
        %s339 = smul.u32 2, %s30
        %s340 = smul.u32 2, %s30
        %s341 = smul.u32 2, %s30
        %s342 = smul.u32 2, %s30
        %v343 = vld [vmem:[%s282] sm:$0xff]
        %v344 = vld [vmem:[%s282 + $0x8] sm:$0xff]
        %s345 = smul.u32 %s29, 128
        %s346 = sld [smem:[#allocation2 + %s345]]
        %v347 = vstv %s346
        %v348 = vmul.f32 %v343, %v347
        %v349 = vmul.f32 %v344, %v347
        %v350 = vld [vmem:[%s292] sm:$0xff]
        %v351 = vld [vmem:[%s292 + $0x8] sm:$0xff]
        %s352 = sadd.s32 %s345, 1
        %s353 = sld [smem:[#allocation2 + %s352]]
        %v354 = vstv %s353
        %v355 = vmul.f32 %v350, %v354
        %v356 = vmul.f32 %v351, %v354
        %v357 = vadd.f32 %v348, %v355
        %v358 = vadd.f32 %v349, %v356
        %v359 = vld [vmem:[%s302] sm:$0xff]
        %v360 = vld [vmem:[%s302 + $0x8] sm:$0xff]
        %s361 = sadd.s32 %s345, 2
        %s362 = sld [smem:[#allocation2 + %s361]]
        %v363 = vstv %s362
        %v364 = vmul.f32 %v359, %v363
        %v365 = vmul.f32 %v360, %v363
        %v366 = vadd.f32 %v357, %v364
        %v367 = vadd.f32 %v358, %v365
        %368 = vst [vmem:[%s338] sm:$0xff] %v366
        %369 = vst [vmem:[%s338 + $0x8] sm:$0xff] %v367
        %s370 = sand.u32 %s152, 1
        %s371 = scalar_lea.sflag [#allocation4], %s370
        %s372 = sand.u32 %s152, 1
        %s373 = smul.addr %s372, 16
        %s374 = scalar_lea.vmem [#allocation10], %s373
        // Predicated region
        $region53: #{tpu_custom_call.1} parent=35 // pred_check
          %p375 = pneg %p162
        $region54: #{tpu_custom_call.1} parent=35 // pred_check_branch
          %377 = sbr.rel (%p375) target = $region56
        $region55: #{tpu_custom_call.1} parent=35 // pred_region
          %s378 = smul.u32 2, %s30
          %380 = vsyncadd %s371, 0
          %s381 = smul.addr %s29, 2
          %s382 = sadd.s32 %s378, %s381
          %s383 = smul.addr %s382, 8
          %s384 = scalar_lea.hbm %s4, %s383
          %s385 = sshll.u32 %s374, 4
          %s386 = int_to_ptr.vmem [resolvable:$true] %s385
          %s387 = sshll.u32 %s384, 4
          %s388 = int_to_ptr.hbm [resolvable:$true] %s387
          %393 = dma.vmem_to_hbm [thread:$0]  %s386, 256, %s388, %s371, 128, 128, 8
        $region56: #{tpu_custom_call.1} parent=35 // pred_fallthru
          _
      $region36: #{tpu_custom_call.1} parent=5 // pred_fallthru
        _
      %p394 = scmp.le.s32.totalorder 2, %s20
      // Predicated region
      $region57: #{tpu_custom_call.1} parent=5 // pred_check
        %p395 = pneg %p394
      $region58: #{tpu_custom_call.1} parent=5 // pred_check_branch
        %397 = sbr.rel (%p395) target = $region60
      $region59: #{tpu_custom_call.1} parent=5 // pred_region
        %s398 = ssub.s32 %s20, 2
        // Predicated region
        $region61: #{tpu_custom_call.1} parent=59 // pred_check
          %p399 = pneg %p168
        $region62: #{tpu_custom_call.1} parent=59 // pred_check_branch
          %401 = sbr.rel (%p399) target = $region64
        $region63: #{tpu_custom_call.1} parent=59 // pred_region
          %s402 = sand.u32 %s153, 1
          %s403 = scalar_lea.sflag [#allocation4], %s402
          %s404 = sand.u32 %s153, 1
          %s405 = smul.addr %s404, 16
          %s406 = scalar_lea.vmem [#allocation10], %s405
          %408 = dma.done %s403, 256
        $region64: #{tpu_custom_call.1} parent=59 // pred_fallthru
          _
      $region60: #{tpu_custom_call.1} parent=5 // pred_fallthru
        _
    $region6: #{tpu_custom_call.1} parent=1 // loop_footer
      %s24 = sadd.s32 1, %s20
    $region7: #{tpu_custom_call.1} parent=1 // loop_footer_branch
      %19 = sbr.rel target = $region3
    $region8: #{tpu_custom_call.1} parent=1 // loop_exit
      _
    %409 = vsyncpa [#allocation3], 1
    %s410 = scalar_lea.sflag [#allocation3], 1
    %411 = vsyncpa %s410, 1
    %412 = vsyncpa [#allocation8], 1
    %s413 = scalar_lea.sflag [#allocation8], 1
    %414 = vsyncpa %s413, 1
    %415 = vsyncpa [#allocation4], 1
    %s416 = scalar_lea.sflag [#allocation4], 1
    %417 = vsyncpa %s416, 1
    %418 = vsyncpa [#allocation5], 1
    %s419 = scalar_lea.sflag [#allocation5], 1
    %420 = vsyncpa %s419, 1

</llo_original>
